<compile_context>
chip_gen: v7x
topology: tpu7x:2x2x1
jax: 0.10.0
libtpu: 0.0.40
codegen_flags: <defaults>
</compile_context>

<pallas_src>
import functools

import jax
import jax.numpy as jnp
import numpy as np
from jax.experimental import pallas as pl
from jax.experimental.pallas import tpu as pltpu


def _round_up(a, b):
    return ((a + b - 1) // b) * b


def _xdropout_kernel(seed_ref, x_ref, o_ref, *, drop_prob, block_rows,
                     block_cols):
    shape = x_ref.shape                       # (block_rows, block_cols)

    # Global element index of every lane in this block (row-major flat index
    # of the slab == flat index of the original activation).  Using the flat
    # index (not the block id) makes the mask independent of the tiling.
    row0 = pl.program_id(0).astype(jnp.uint32) * jnp.uint32(block_rows)
    r = jax.lax.broadcasted_iota(jnp.int32, shape, 0).astype(jnp.uint32)
    c = jax.lax.broadcasted_iota(jnp.int32, shape, 1).astype(jnp.uint32)
    idx = (row0 + r) * jnp.uint32(block_cols) + c

    # Counter-based PRNG: murmur3 fmix32 of (flat index ^ mixed seed).
    seed32 = seed_ref[0].astype(jnp.uint32) * jnp.uint32(0x9E3779B9)
    h = idx ^ seed32
    h = h ^ (h >> 16)
    h = h * jnp.uint32(0x85EBCA6B)
    h = h ^ (h >> 13)
    h = h * jnp.uint32(0xC2B2AE35)
    h = h ^ (h >> 16)

    # Direct integer threshold: P(keep) = 1 - drop_prob (exact to 2^-32).
    threshold = jnp.uint32(min(int(round(drop_prob * 2.0**32)), 2**32 - 1))
    keep = h >= threshold

    # Compute in the input dtype (native bf16 on v6e/v7x, f32 otherwise).
    x = x_ref[...]
    scale = jnp.asarray(1.0 / (1.0 - drop_prob), dtype=x.dtype)
    o_ref[...] = jnp.where(keep, x * scale, jnp.zeros_like(x)).astype(
        o_ref.dtype)


def stable_dropout(x, drop_prob, seed, training=True):
    """Forward of StableDropout.  Identity unless (training and drop_prob>0)."""
    if (not training) or drop_prob <= 0.0:
        return x
    if drop_prob >= 1.0:
        return jnp.zeros_like(x)

    orig_shape = x.shape
    total = int(np.prod(orig_shape)) if len(orig_shape) else 1
    itemsize = x.dtype.itemsize
    target_elems = max(8 * 128, (2 * 1024 * 1024) // itemsize)  # ~2 MiB tiles

    last = orig_shape[-1] if x.ndim >= 1 else 1
    rows = total // last if last else 0

    if x.ndim >= 2 and last % 128 == 0 and rows % 8 == 0:
        # Fast path: collapse leading dims (free reshape), no pad, no slice.
        block_cols = last
        slab = x.reshape(rows, block_cols)
        block_rows = max(8, (target_elems // block_cols) // 8 * 8)
        block_rows = min(block_rows, rows)
        padded = False
    else:
        # Ragged fallback: flatten + pad to a lane-dense slab.
        block_cols = 512
        n_rows = -(-total // block_cols)                      # cdiv
        block_rows = min(512, _round_up(max(n_rows, 1), 8))
        padded_rows = _round_up(n_rows, block_rows)
        flat = x.reshape(-1)
        flat = jnp.pad(flat, (0, padded_rows * block_cols - total))
        slab = flat.reshape(padded_rows, block_cols)
        padded = True

    n_blocks = -(-slab.shape[0] // block_rows)                # cdiv
    tile_bytes = block_rows * block_cols * itemsize
    # input + output are each double-buffered (~4x tile); cap at 32 MiB so the
    # same code path fits v7x's 64 MiB VMEM while raising v5e's 16 MiB default.
    vmem_limit = int(min(32 * 1024 * 1024,
                         max(16 * 1024 * 1024, 8 * tile_bytes)))

    seed_arr = jnp.asarray([seed], dtype=jnp.int32)
    kernel = functools.partial(_xdropout_kernel, drop_prob=float(drop_prob),
                               block_rows=block_rows, block_cols=block_cols)

    out = pl.pallas_call(
        kernel,
        out_shape=jax.ShapeDtypeStruct(slab.shape, x.dtype),
        grid_spec=pltpu.PrefetchScalarGridSpec(
            num_scalar_prefetch=1,
            grid=(n_blocks,),
            in_specs=[pl.BlockSpec((block_rows, block_cols),
                                   lambda i, s: (i, 0))],
            out_specs=pl.BlockSpec((block_rows, block_cols),
                                   lambda i, s: (i, 0)),
        ),
        compiler_params=pltpu.CompilerParams(
            dimension_semantics=("parallel",),
            vmem_limit_bytes=vmem_limit),
        cost_estimate=pl.CostEstimate(
            flops=2 * slab.size,
            transcendentals=0,
            bytes_accessed=2 * slab.size * itemsize),
    )(seed_arr, slab)

    if padded:
        return out.reshape(-1)[:total].reshape(orig_shape)
    return out.reshape(orig_shape)


if __name__ == "__main__":
    key = jax.random.PRNGKey(0)
    k1, k2 = jax.random.split(key)

    B, S, H = 2, 8, 256           # typical (small) DeBERTa activation slab
    drop_prob = 0.1
    scale = 1.0 / (1.0 - drop_prob)
    x = jax.random.normal(k1, (B, S, H), jnp.float32)

    # --- training path -------------------------------------------------------
    y = jax.block_until_ready(stable_dropout(x, drop_prob, seed=1234,
                                             training=True))
    xn, yn = np.asarray(x), np.asarray(y)
    kept = yn != 0.0
    # every surviving element is exactly x * 1/(1-p)
    np.testing.assert_allclose(yn[kept], (xn * scale)[kept],
                               rtol=1e-6, atol=1e-6)
    # drop fraction is statistically consistent with drop_prob
    frac_dropped = 1.0 - kept.mean()
    assert abs(frac_dropped - drop_prob) < 0.05, frac_dropped

    # same seed -> same mask (functional analogue of DropoutContext.reuse_mask)
    y2 = jax.block_until_ready(stable_dropout(x, drop_prob, seed=1234,
                                              training=True))
    np.testing.assert_array_equal(np.asarray(y2), yn)

    # ragged shape exercises the padded fallback path
    x3 = jax.random.normal(k2, (3, 5, 33), jnp.float32)
    y3 = jax.block_until_ready(stable_dropout(x3, drop_prob, seed=7,
                                              training=True))
    x3n, y3n = np.asarray(x3), np.asarray(y3)
    kept3 = y3n != 0.0
    np.testing.assert_allclose(y3n[kept3], (x3n * scale)[kept3],
                               rtol=1e-6, atol=1e-6)

    # --- eval path (StableDropout.forward when not training / p == 0) --------
    y_eval = jax.block_until_ready(stable_dropout(x, drop_prob, seed=1234,
                                                  training=False))
    np.testing.assert_array_equal(np.asarray(y_eval), xn)
    y_p0 = jax.block_until_ready(stable_dropout(x, 0.0, seed=1234,
                                                training=True))
    np.testing.assert_array_equal(np.asarray(y_p0), xn)

    print("KERNEL_OK")
</pallas_src>

<mosaic_0001>
module attributes {stable_mosaic.version = 11 : i64} {
  func.func @_xdropout_kernel(%arg0: i32, %arg1: memref<1xi32, #tpu.memory_space<smem>>, %arg2: memref<16x256xf32, #tpu.memory_space<vmem>>, %arg3: memref<16x256xf32, #tpu.memory_space<vmem>>) attributes {dimension_semantics = [#tpu.dimension_semantics<parallel>], iteration_bounds = array<i64: 1>, scalar_prefetch = 1 : i64, scratch_operands = 0 : i64, tpu.core_type = #tpu.core_type<tc>, window_params = [{transform_indices = @transform_0, window_bounds = array<i64: 16, 256>}, {transform_indices = @transform_1, window_bounds = array<i64: 16, 256>}]} {
    %c16_i32 = arith.constant 16 : i32
    %0 = arith.muli %arg0, %c16_i32 : i32
    %1 = tpu.iota {dimensions = array<i32: 0>} : vector<16x256xi32>
    %2 = tpu.iota {dimensions = array<i32: 1>} : vector<16x256xi32>
    %3 = vector.broadcast %0 : i32 to vector<16x256xi32>
    %4 = arith.addi %3, %1 : vector<16x256xi32>
    %c256_i32 = arith.constant 256 : i32
    %5 = vector.broadcast %c256_i32 : i32 to vector<16x256xi32>
    %6 = arith.muli %4, %5 : vector<16x256xi32>
    %7 = arith.addi %6, %2 : vector<16x256xi32>
    %c0 = arith.constant 0 : index
    %8 = memref.load %arg1[%c0] : memref<1xi32, #tpu.memory_space<smem>>
    %c-1640531527_i32 = arith.constant -1640531527 : i32
    %9 = arith.muli %8, %c-1640531527_i32 : i32
    %10 = vector.broadcast %9 : i32 to vector<16x256xi32>
    %11 = arith.xori %7, %10 : vector<16x256xi32>
    %c16_i32_0 = arith.constant 16 : i32
    %12 = vector.broadcast %c16_i32_0 : i32 to vector<16x256xi32>
    %13 = arith.shrui %11, %12 : vector<16x256xi32>
    %14 = arith.xori %11, %13 : vector<16x256xi32>
    %c-2048144789_i32 = arith.constant -2048144789 : i32
    %15 = vector.broadcast %c-2048144789_i32 : i32 to vector<16x256xi32>
    %16 = arith.muli %14, %15 : vector<16x256xi32>
    %c13_i32 = arith.constant 13 : i32
    %17 = vector.broadcast %c13_i32 : i32 to vector<16x256xi32>
    %18 = arith.shrui %16, %17 : vector<16x256xi32>
    %19 = arith.xori %16, %18 : vector<16x256xi32>
    %c-1028477387_i32 = arith.constant -1028477387 : i32
    %20 = vector.broadcast %c-1028477387_i32 : i32 to vector<16x256xi32>
    %21 = arith.muli %19, %20 : vector<16x256xi32>
    %c16_i32_1 = arith.constant 16 : i32
    %22 = vector.broadcast %c16_i32_1 : i32 to vector<16x256xi32>
    %23 = arith.shrui %21, %22 : vector<16x256xi32>
    %24 = arith.xori %21, %23 : vector<16x256xi32>
    %c429496730_i32 = arith.constant 429496730 : i32
    %25 = vector.broadcast %c429496730_i32 : i32 to vector<16x256xi32>
    %26 = arith.cmpi uge, %24, %25 : vector<16x256xi32>
    %c0_2 = arith.constant 0 : index
    %c0_3 = arith.constant 0 : index
    %27 = vector.load %arg2[%c0_2, %c0_3] : memref<16x256xf32, #tpu.memory_space<vmem>>, vector<16x256xf32>
    %cst = arith.constant 1.11111116 : f32
    %28 = vector.broadcast %cst : f32 to vector<16x256xf32>
    %29 = arith.mulf %27, %28 : vector<16x256xf32>
    %cst_4 = arith.constant 0.000000e+00 : f32
    %30 = vector.broadcast %cst_4 : f32 to vector<16x256xf32>
    %31 = arith.select %26, %29, %30 : vector<16x256xi1>, vector<16x256xf32>
    %c0_5 = arith.constant 0 : index
    %c0_6 = arith.constant 0 : index
    %32 = vector.load %arg3[%c0_5, %c0_6] : memref<16x256xf32, #tpu.memory_space<vmem>>, vector<16x256xf32>
    tpu.vector_store %arg3[%c0_5, %c0_6], %31 {strides = array<i32>} : memref<16x256xf32, #tpu.memory_space<vmem>>, vector<16x256xf32>,
    return
  }
  func.func @transform_0(%arg0: i32, %arg1: memref<1xi32, #tpu.memory_space<smem>>) -> (i32, i32) {
    %c0_i32 = arith.constant 0 : i32
    %c0_i32_0 = arith.constant 0 : i32
    return %arg0, %c0_i32 : i32, i32
  }
  func.func @transform_1(%arg0: i32, %arg1: memref<1xi32, #tpu.memory_space<smem>>) -> (i32, i32) {
    %c0_i32 = arith.constant 0 : i32
    %c0_i32_0 = arith.constant 0 : i32
    return %arg0, %c0_i32 : i32, i32
  }
}

</mosaic_0001>

<llo_original>
// kernel: tpu_custom_call.1
$region0: #{tpu_custom_call.1}
  #allocation0 [shape = 'u32[]', space=smem, size = 0x4, offset = 0x4, fixed_abs, tag = 'smem constant byte address 0x4 - core index']
  #allocation1 [shape = 'u32[144,128]{1,0:T(1,128)}', space=vmem, size = 0x12000, scoped, tag = 'internal scratch']
  #allocation2 [shape = 's32[1]{0}', space=sflag, size = 0x4, scoped, tag = 'scoped memory for tpu_custom_call.1']
  #allocation3 [shape = 's32[1]{0:T(128)S(6)}', space=smem, size = 0x200, scoped, tag = 'prefetched SMEM operand 0']
  %s0 = inlined_call_operand.<no memory space> [shape: s32[1], index: 0, kind: input, shape index: {}]
  %s1 = inlined_call_operand.hbm [shape: f32[16,256], index: 1, kind: input, shape index: {}]
  %s2 = inlined_call_operand.hbm [shape: f32[16,256], index: 2, kind: output, shape index: {}]
  %s3 = sld [smem:[#allocation0]]
  $region18: #{tpu_custom_call.1} parent=0
    _
  %s5 = ssub.s32 1, %s3
  %s6 = scalar_select 0, %s5, %s3
  %7 = sst [smem:[#allocation3]] %s0
  $region1: #{tpu_custom_call.1} parent=0
    #allocation4 [shape = 'u8[16384]{0}', space=vmem, size = 0x4000, scoped, tag = 'input window, operand 1, single buffered']
    #allocation5 [shape = 's32[1]{0}', space=sflag, size = 0x4, scoped, tag = 'scoped memory for tpu_custom_call.1']
    #allocation6 [shape = 's32[1]{0}', space=sflag, size = 0x4, scoped, tag = 'scoped memory for tpu_custom_call.1']
    #allocation7 [shape = 'u8[16384]{0}', space=vmem, size = 0x4000, scoped, tag = 'output window, operand 0, single buffered']
    %8 = vsyncpa [#allocation5], 0
    %9 = vsyncpa [#allocation6], 0
    // Predicated region
    $region2: #{tpu_custom_call.1} parent=1 // pred_check
      _
    $region3: #{tpu_custom_call.1} parent=1 // pred_check_branch
      %11 = sbr.rel (0) target = $region5
    $region4: #{tpu_custom_call.1} parent=1 // pred_region
      %s13 = ssub.s32 512, 512
      %14 = vsyncadd [#allocation5], %s13
      %s15 = sshll.u32 [#allocation4], 4
      %s16 = int_to_ptr.vmem [resolvable:$true] %s15
      %21 = dma.hbm_to_vmem [thread:$0]  %s1, 512, %s16, [#allocation5], 256, 256, 16
    $region5: #{tpu_custom_call.1} parent=1 // pred_fallthru
      _
    // Predicated region
    $region6: #{tpu_custom_call.1} parent=1 // pred_check
      _
    $region7: #{tpu_custom_call.1} parent=1 // pred_check_branch
      %23 = sbr.rel (0) target = $region9
    $region8: #{tpu_custom_call.1} parent=1 // pred_region
      %24 = dma.done [#allocation5], 512
    $region9: #{tpu_custom_call.1} parent=1 // pred_fallthru
      _
    %s25 = smul.u32 0, 16
    %v26 = vlaneseq
    %v27 = vshrl.u32 %v26, 7
    %v28 = vadd.s32 %v27, 8
    %v29 = vlaneseq
    %v30 = vand.u32 %v29, 127
    %v31 = vadd.s32 %v30, 128
    %v32 = vstv %s25
    %v33 = vadd.s32 %v32, %v27
    %v34 = vadd.s32 %v32, %v28
    %v35 = vmul.u32 %v33, 256
    %v36 = vmul.u32 %v34, 256
    %v37 = vadd.s32 %v35, %v30
    %v38 = vadd.s32 %v35, %v31
    %v39 = vadd.s32 %v36, %v30
    %v40 = vadd.s32 %v36, %v31
    %s41 = sld [smem:[#allocation3]]
    %s42 = smul.u32 %s41, 2654435769
    %v43 = vstv %s42
    %v44 = vxor.u32 %v37, %v43
    %v45 = vxor.u32 %v38, %v43
    %v46 = vxor.u32 %v39, %v43
    %v47 = vxor.u32 %v40, %v43
    %v48 = vshrl.u32 %v44, 16
    %v49 = vshrl.u32 %v45, 16
    %v50 = vshrl.u32 %v46, 16
    %v51 = vshrl.u32 %v47, 16
    %v52 = vxor.u32 %v44, %v48
    %v53 = vxor.u32 %v45, %v49
    %v54 = vxor.u32 %v46, %v50
    %v55 = vxor.u32 %v47, %v51
    %v56 = vmul.u32 %v52, 2246822507
    %v57 = vmul.u32 %v53, 2246822507
    %v58 = vmul.u32 %v54, 2246822507
    %v59 = vmul.u32 %v55, 2246822507
    %v60 = vshrl.u32 %v56, 13
    %v61 = vshrl.u32 %v57, 13
    %v62 = vshrl.u32 %v58, 13
    %v63 = vshrl.u32 %v59, 13
    %v64 = vxor.u32 %v56, %v60
    %v65 = vxor.u32 %v57, %v61
    %v66 = vxor.u32 %v58, %v62
    %v67 = vxor.u32 %v59, %v63
    %v68 = vmul.u32 %v64, 3266489909
    %v69 = vmul.u32 %v65, 3266489909
    %v70 = vmul.u32 %v66, 3266489909
    %v71 = vmul.u32 %v67, 3266489909
    %v72 = vshrl.u32 %v68, 16
    %v73 = vshrl.u32 %v69, 16
    %v74 = vshrl.u32 %v70, 16
    %v75 = vshrl.u32 %v71, 16
    %v76 = vxor.u32 %v68, %v72
    %v77 = vxor.u32 %v69, %v73
    %v78 = vxor.u32 %v70, %v74
    %v79 = vxor.u32 %v71, %v75
    %vm80 = vcmp.ge.u32.totalorder %v76, 429496730
    %vm81 = vcmp.ge.u32.totalorder %v77, 429496730
    %vm82 = vcmp.ge.u32.totalorder %v78, 429496730
    %vm83 = vcmp.ge.u32.totalorder %v79, 429496730
    %v84 = vld [vmem:[#allocation4] sm:$0xff]
    %v85 = vld [vmem:[#allocation4 + $0x8] sm:$0xff]
    %v86 = vld [vmem:[#allocation4 + $0x10] sm:$0xff]
    %v87 = vld [vmem:[#allocation4 + $0x18] sm:$0xff]
    %v88 = vmul.f32 %v84, 1.1111112
    %v89 = vmul.f32 %v85, 1.1111112
    %v90 = vmul.f32 %v86, 1.1111112
    %v91 = vmul.f32 %v87, 1.1111112
    %v92 = vsel %vm80, %v88, 0.0
    %v93 = vsel %vm81, %v89, 0.0
    %v94 = vsel %vm82, %v90, 0.0
    %v95 = vsel %vm83, %v91, 0.0
    %96 = vst [vmem:[#allocation7] sm:$0xff] %v92
    %97 = vst [vmem:[#allocation7 + $0x8] sm:$0xff] %v93
    %98 = vst [vmem:[#allocation7 + $0x10] sm:$0xff] %v94
    %99 = vst [vmem:[#allocation7 + $0x18] sm:$0xff] %v95
    // Predicated region
    $region10: #{tpu_custom_call.1} parent=1 // pred_check
      _
    $region11: #{tpu_custom_call.1} parent=1 // pred_check_branch
      %101 = sbr.rel (0) target = $region13
    $region12: #{tpu_custom_call.1} parent=1 // pred_region
      %s103 = ssub.s32 512, 512
      %104 = vsyncadd [#allocation6], %s103
      %s105 = sshll.u32 [#allocation7], 4
      %s106 = int_to_ptr.vmem [resolvable:$true] %s105
      %111 = dma.vmem_to_hbm [thread:$0]  %s106, 512, %s2, [#allocation6], 256, 256, 16
    $region13: #{tpu_custom_call.1} parent=1 // pred_fallthru
      _
    // Predicated region
    $region14: #{tpu_custom_call.1} parent=1 // pred_check
      _
    $region15: #{tpu_custom_call.1} parent=1 // pred_check_branch
      %113 = sbr.rel (0) target = $region17
    $region16: #{tpu_custom_call.1} parent=1 // pred_region
      %114 = dma.done [#allocation6], 512
    $region17: #{tpu_custom_call.1} parent=1 // pred_fallthru
      _
    %115 = vsyncpa [#allocation5], 1
    %116 = vsyncpa [#allocation6], 1

</llo_original>
